<compile_context>
chip_gen: v6e
topology: v6e:2x2x1
jax: 0.10.0
libtpu: 0.0.40
codegen_flags: <defaults>
</compile_context>

<pallas_src>
import functools

import jax
import jax.numpy as jnp
from jax.experimental import pallas as pl
from jax.experimental.pallas import tpu as pltpu

SUBLANES = 8
LANE_CHOICES = (1024, 512, 256, 128)
NUM_SHARDS = 2                     # leading 'parallel' axis (v7x megacore)
MAX_BLOCK_ELEMS_SUM = 1 << 20      # 4 MiB f32 per stream on the 'all' path
MAX_BLOCK_ELEMS_MAP = 1 << 19      # 2 MiB f32 per stream on the 'none' path
VMEM_LIMIT_BYTES = 48 << 20        # > worst-case 24 MiB use, < 64 MiB v7x phys


# ---------------------------------------------------------------------------
# Kernels
# ---------------------------------------------------------------------------
def _mask_loss_sum_kernel(x_ref, y_ref, m_ref, sl_ref, sm_ref,
                          *, steps, tile_r, rows):
    """reduction='all': accumulate sum(masked_loss) and sum(mask).

    sl_ref / sm_ref are (8, lane_w) f32 output blocks, VMEM-resident across
    the inner 'arbitrary' grid axis (one block per shard of the 'parallel'
    axis).  Rows >= `rows` (ragged tail / duplicated over-shard blocks) are
    zeroed with jnp.where because OOB reads return garbage (possibly NaN/Inf).
    """
    c = pl.program_id(0)
    j = pl.program_id(1)

    @pl.when(j == 0)
    def _():
        sl_ref[...] = jnp.zeros_like(sl_ref)
        sm_ref[...] = jnp.zeros_like(sm_ref)

    x = x_ref[...].astype(jnp.float32)
    y = y_ref[...].astype(jnp.float32)
    m = m_ref[...].astype(jnp.float32)

    row_start = (c * steps + j) * tile_r
    rid = row_start + jax.lax.broadcasted_iota(jnp.int32, x.shape, 0)
    valid = rid < rows

    d = x - y
    ml = jnp.where(valid, d * d * m, 0.0)     # elementwise MSE * mask
    mm = jnp.where(valid, m, 0.0)

    lane_w = x.shape[1]
    # Sublane/lane-parallel partial sums: pure VPU adds into resident blocks
    # (no per-step XLU lane reduce; the tiny final reduce happens in the
    # wrapper once).
    sl_ref[...] += jnp.sum(ml.reshape(-1, SUBLANES, lane_w), axis=0)
    sm_ref[...] += jnp.sum(mm.reshape(-1, SUBLANES, lane_w), axis=0)


def _mask_loss_map_kernel(x_ref, y_ref, m_ref, o_ref):
    """reduction='none': elementwise masked loss.

    No tail masking needed: out-of-bounds rows of a partial output block are
    discarded on writeback.
    """
    d = x_ref[...].astype(jnp.float32) - y_ref[...].astype(jnp.float32)
    o_ref[...] = (d * d * m_ref[...].astype(jnp.float32)).astype(o_ref.dtype)


# ---------------------------------------------------------------------------
# Wrapper helpers
# ---------------------------------------------------------------------------
def _round_up(v, m):
    return ((v + m - 1) // m) * m


def _flatten_2d(arrs, total):
    """View each array as (rows, lane_w) with rows % 8 == 0, copy-free when
    possible (contiguous reshape). Returns (views, rows, lane_w, covered)."""
    for lane_w in LANE_CHOICES:
        if total % lane_w == 0 and (total // lane_w) % SUBLANES == 0:
            rows = total // lane_w
            return [a.reshape(rows, lane_w) for a in arrs], rows, lane_w, total
    # TODO(synk): odd totals fall back to a single zero-pad copy (jnp.pad
    # re-materializes the inputs); fully pad-free ragged handling would need
    # element-granular masking on 1-D blocks.
    lane_w = 128
    padded = _round_up(total, SUBLANES * lane_w)
    views = [jnp.pad(a.reshape(-1), (0, padded - total)).reshape(-1, lane_w)
             for a in arrs]
    return views, padded // lane_w, lane_w, padded


def _mask_loss_all(x, y, mask):
    total = x.size
    (x2, y2, m2), rows, lane_w, _ = _flatten_2d((x, y, mask), total)

    max_tile = MAX_BLOCK_ELEMS_SUM // lane_w
    tile_r = min(max_tile,
                 _round_up(pl.cdiv(rows, NUM_SHARDS), SUBLANES),
                 rows)
    num_tiles = pl.cdiv(rows, tile_r)
    steps = pl.cdiv(num_tiles, NUM_SHARDS)

    def in_map(c, j):
        # Clamp so over-shard block indices stay in bounds; the in-kernel row
        # mask zeroes any duplicated / out-of-range rows.
        return (jnp.minimum(c * steps + j, num_tiles - 1), 0)

    in_spec = pl.BlockSpec((tile_r, lane_w), in_map)
    acc_spec = pl.BlockSpec((SUBLANES, lane_w), lambda c, j: (c, 0))

    kernel = functools.partial(_mask_loss_sum_kernel,
                               steps=steps, tile_r=tile_r, rows=rows)

    sl, sm = pl.pallas_call(
        kernel,
        out_shape=(
            jax.ShapeDtypeStruct((NUM_SHARDS * SUBLANES, lane_w), jnp.float32),
            jax.ShapeDtypeStruct((NUM_SHARDS * SUBLANES, lane_w), jnp.float32),
        ),
        grid=(NUM_SHARDS, steps),
        in_specs=[in_spec, in_spec, in_spec],
        out_specs=(acc_spec, acc_spec),
        compiler_params=pltpu.CompilerParams(
            dimension_semantics=("parallel", "arbitrary"),
            vmem_limit_bytes=VMEM_LIMIT_BYTES,
        ),
    )(x2, y2, m2)

    # Note: a zero mask divides by zero (inf/nan) -- identical to the PyTorch
    # reference semantics.
    return (jnp.sum(sl) / jnp.sum(sm)).astype(jnp.float32)


def _mask_loss_none(x, y, mask):
    orig_shape = x.shape
    total = x.size
    out_dt = jnp.result_type(x.dtype, y.dtype, mask.dtype)
    (x2, y2, m2), rows, lane_w, covered = _flatten_2d((x, y, mask), total)

    max_tile = MAX_BLOCK_ELEMS_MAP // lane_w
    tile_r = min(max_tile, rows)
    grid = (pl.cdiv(rows, tile_r),)

    spec = pl.BlockSpec((tile_r, lane_w), lambda i: (i, 0))

    loss = pl.pallas_call(
        _mask_loss_map_kernel,
        out_shape=jax.ShapeDtypeStruct((rows, lane_w), out_dt),
        grid=grid,
        in_specs=[spec, spec, spec],
        out_specs=spec,
        compiler_params=pltpu.CompilerParams(
            dimension_semantics=("parallel",),
            vmem_limit_bytes=VMEM_LIMIT_BYTES,
        ),
    )(x2, y2, m2)

    flat = loss.reshape(-1)
    if covered != total:
        flat = flat[:total]
    return flat.reshape(orig_shape)


def mask_loss(x, y, mask, reduction="all"):
    """x, y, mask: arrays of identical shape (any size / dtype)."""
    assert x.shape == y.shape == mask.shape
    if reduction == "all":
        return _mask_loss_all(x, y, mask)
    elif reduction == "none":
        return _mask_loss_none(x, y, mask)
    else:
        raise ValueError(f"unknown reduction: {reduction}")


# ---------------------------------------------------------------------------
# Reference + test
# ---------------------------------------------------------------------------
def _reference(x, y, mask, reduction):
    loss = (x - y) ** 2 * mask
    if reduction == "all":
        return jnp.sum(loss) / jnp.sum(mask)
    return loss


if __name__ == "__main__":
    key = jax.random.PRNGKey(0)
    kx, ky, km = jax.random.split(key, 3)

    # Main test: lane-aligned shape (copy-free path).
    B, C, H, W = 2, 4, 16, 16
    x = jax.random.normal(kx, (B, C, H, W), dtype=jnp.float32)
    y = jax.random.normal(ky, (B, C, H, W), dtype=jnp.float32)
    mask = (jax.random.uniform(km, (B, C, H, W)) > 0.5).astype(jnp.float32)

    out_all = mask_loss(x, y, mask, reduction="all")
    out_none = mask_loss(x, y, mask, reduction="none")
    jax.block_until_ready(out_all)
    jax.block_until_ready(out_none)

    assert jnp.allclose(out_all, _reference(x, y, mask, "all"),
                        rtol=1e-5, atol=1e-5)
    assert jnp.allclose(out_none, _reference(x, y, mask, "none"),
                        rtol=1e-5, atol=1e-5)

    # Secondary test: unaligned shape exercising the ragged-tail / pad path.
    shp = (2, 3, 7, 5)
    x2 = jax.random.normal(kx, shp, dtype=jnp.float32)
    y2 = jax.random.normal(ky, shp, dtype=jnp.float32)
    m2 = (jax.random.uniform(km, shp) > 0.5).astype(jnp.float32)

    out_all2 = mask_loss(x2, y2, m2, reduction="all")
    out_none2 = mask_loss(x2, y2, m2, reduction="none")
    jax.block_until_ready(out_all2)
    jax.block_until_ready(out_none2)

    assert jnp.allclose(out_all2, _reference(x2, y2, m2, "all"),
                        rtol=1e-5, atol=1e-5)
    assert jnp.allclose(out_none2, _reference(x2, y2, m2, "none"),
                        rtol=1e-5, atol=1e-5)

    print("KERNEL_OK")
</pallas_src>

<mosaic_0001>
module attributes {stable_mosaic.version = 11 : i64} {
  func.func @_mask_loss_sum_kernel(%arg0: i32, %arg1: i32, %arg2: memref<8x256xf32, #tpu.memory_space<vmem>>, %arg3: memref<8x256xf32, #tpu.memory_space<vmem>>, %arg4: memref<8x256xf32, #tpu.memory_space<vmem>>, %arg5: memref<8x256xf32, #tpu.memory_space<vmem>>, %arg6: memref<8x256xf32, #tpu.memory_space<vmem>>) attributes {dimension_semantics = [#tpu.dimension_semantics<parallel>, #tpu.dimension_semantics<arbitrary>], iteration_bounds = array<i64: 2, 1>, scalar_prefetch = 0 : i64, scratch_operands = 0 : i64, tpu.core_type = #tpu.core_type<tc>, window_params = [{transform_indices = @transform_0, window_bounds = array<i64: 8, 256>}, {transform_indices = @transform_1, window_bounds = array<i64: 8, 256>}, {transform_indices = @transform_2, window_bounds = array<i64: 8, 256>}, {transform_indices = @transform_3, window_bounds = array<i64: 8, 256>}, {transform_indices = @transform_4, window_bounds = array<i64: 8, 256>}]} {
    %c0_i32 = arith.constant 0 : i32
    %0 = arith.cmpi eq, %arg1, %c0_i32 : i32
    %1 = arith.extui %0 : i1 to i32
    %c0_i32_0 = arith.constant 0 : i32
    %2 = arith.cmpi ne, %1, %c0_i32_0 : i32
    scf.if %2 {
      %cst_18 = arith.constant 0.000000e+00 : f32
      %31 = vector.broadcast %cst_18 : f32 to vector<8x256xf32>
      %c0_19 = arith.constant 0 : index
      %c0_20 = arith.constant 0 : index
      %32 = vector.load %arg5[%c0_19, %c0_20] : memref<8x256xf32, #tpu.memory_space<vmem>>, vector<8x256xf32>
      tpu.vector_store %arg5[%c0_19, %c0_20], %31 {strides = array<i32>} : memref<8x256xf32, #tpu.memory_space<vmem>>, vector<8x256xf32>,
      %cst_21 = arith.constant 0.000000e+00 : f32
      %33 = vector.broadcast %cst_21 : f32 to vector<8x256xf32>
      %c0_22 = arith.constant 0 : index
      %c0_23 = arith.constant 0 : index
      %34 = vector.load %arg6[%c0_22, %c0_23] : memref<8x256xf32, #tpu.memory_space<vmem>>, vector<8x256xf32>
      tpu.vector_store %arg6[%c0_22, %c0_23], %33 {strides = array<i32>} : memref<8x256xf32, #tpu.memory_space<vmem>>, vector<8x256xf32>,
    } else {
    }
    %c0 = arith.constant 0 : index
    %c0_1 = arith.constant 0 : index
    %3 = vector.load %arg2[%c0, %c0_1] : memref<8x256xf32, #tpu.memory_space<vmem>>, vector<8x256xf32>
    %c0_2 = arith.constant 0 : index
    %c0_3 = arith.constant 0 : index
    %4 = vector.load %arg3[%c0_2, %c0_3] : memref<8x256xf32, #tpu.memory_space<vmem>>, vector<8x256xf32>
    %c0_4 = arith.constant 0 : index
    %c0_5 = arith.constant 0 : index
    %5 = vector.load %arg4[%c0_4, %c0_5] : memref<8x256xf32, #tpu.memory_space<vmem>>, vector<8x256xf32>
    %c1_i32 = arith.constant 1 : i32
    %6 = arith.muli %arg0, %c1_i32 : i32
    %7 = arith.addi %6, %arg1 : i32
    %c8_i32 = arith.constant 8 : i32
    %8 = arith.muli %7, %c8_i32 : i32
    %9 = tpu.iota {dimensions = array<i32: 0>} : vector<8x256xi32>
    %10 = vector.broadcast %8 : i32 to vector<8x256xi32>
    %11 = arith.addi %10, %9 : vector<8x256xi32>
    %c8_i32_6 = arith.constant 8 : i32
    %12 = vector.broadcast %c8_i32_6 : i32 to vector<8x256xi32>
    %13 = arith.cmpi slt, %11, %12 : vector<8x256xi32>
    %14 = arith.subf %3, %4 : vector<8x256xf32>
    %15 = arith.mulf %14, %14 : vector<8x256xf32>
    %16 = arith.mulf %15, %5 : vector<8x256xf32>
    %cst = arith.constant 0.000000e+00 : f32
    %17 = vector.broadcast %cst : f32 to vector<8x256xf32>
    %18 = arith.select %13, %16, %17 : vector<8x256xi1>, vector<8x256xf32>
    %cst_7 = arith.constant 0.000000e+00 : f32
    %19 = vector.broadcast %cst_7 : f32 to vector<8x256xf32>
    %20 = arith.select %13, %5, %19 : vector<8x256xi1>, vector<8x256xf32>
    %c0_8 = arith.constant 0 : index
    %c0_9 = arith.constant 0 : index
    %21 = vector.load %arg5[%c0_8, %c0_9] : memref<8x256xf32, #tpu.memory_space<vmem>>, vector<8x256xf32>
    %22 = vector.shape_cast %18 : vector<8x256xf32> to vector<1x8x256xf32>
    %cst_10 = arith.constant dense<0.000000e+00> : vector<8x256xf32>
    %23 = vector.multi_reduction <add>, %22, %cst_10 [0] : vector<1x8x256xf32> to vector<8x256xf32>
    %24 = arith.addf %21, %23 : vector<8x256xf32>
    %c0_11 = arith.constant 0 : index
    %c0_12 = arith.constant 0 : index
    %25 = vector.load %arg5[%c0_11, %c0_12] : memref<8x256xf32, #tpu.memory_space<vmem>>, vector<8x256xf32>
    tpu.vector_store %arg5[%c0_11, %c0_12], %24 {strides = array<i32>} : memref<8x256xf32, #tpu.memory_space<vmem>>, vector<8x256xf32>,
    %c0_13 = arith.constant 0 : index
    %c0_14 = arith.constant 0 : index
    %26 = vector.load %arg6[%c0_13, %c0_14] : memref<8x256xf32, #tpu.memory_space<vmem>>, vector<8x256xf32>
    %27 = vector.shape_cast %20 : vector<8x256xf32> to vector<1x8x256xf32>
    %cst_15 = arith.constant dense<0.000000e+00> : vector<8x256xf32>
    %28 = vector.multi_reduction <add>, %27, %cst_15 [0] : vector<1x8x256xf32> to vector<8x256xf32>
    %29 = arith.addf %26, %28 : vector<8x256xf32>
    %c0_16 = arith.constant 0 : index
    %c0_17 = arith.constant 0 : index
    %30 = vector.load %arg6[%c0_16, %c0_17] : memref<8x256xf32, #tpu.memory_space<vmem>>, vector<8x256xf32>
    tpu.vector_store %arg6[%c0_16, %c0_17], %29 {strides = array<i32>} : memref<8x256xf32, #tpu.memory_space<vmem>>, vector<8x256xf32>,
    return
  }
  func.func @transform_0(%arg0: i32, %arg1: i32) -> (i32, i32) {
    %c1_i32 = arith.constant 1 : i32
    %0 = arith.muli %arg0, %c1_i32 : i32
    %1 = arith.addi %0, %arg1 : i32
    %c0_i32 = arith.constant 0 : i32
    %2 = arith.minsi %1, %c0_i32 : i32
    %c0_i32_0 = arith.constant 0 : i32
    %c0_i32_1 = arith.constant 0 : i32
    return %2, %c0_i32_0 : i32, i32
  }
  func.func @transform_1(%arg0: i32, %arg1: i32) -> (i32, i32) {
    %c1_i32 = arith.constant 1 : i32
    %0 = arith.muli %arg0, %c1_i32 : i32
    %1 = arith.addi %0, %arg1 : i32
    %c0_i32 = arith.constant 0 : i32
    %2 = arith.minsi %1, %c0_i32 : i32
    %c0_i32_0 = arith.constant 0 : i32
    %c0_i32_1 = arith.constant 0 : i32
    return %2, %c0_i32_0 : i32, i32
  }
  func.func @transform_2(%arg0: i32, %arg1: i32) -> (i32, i32) {
    %c1_i32 = arith.constant 1 : i32
    %0 = arith.muli %arg0, %c1_i32 : i32
    %1 = arith.addi %0, %arg1 : i32
    %c0_i32 = arith.constant 0 : i32
    %2 = arith.minsi %1, %c0_i32 : i32
    %c0_i32_0 = arith.constant 0 : i32
    %c0_i32_1 = arith.constant 0 : i32
    return %2, %c0_i32_0 : i32, i32
  }
  func.func @transform_3(%arg0: i32, %arg1: i32) -> (i32, i32) {
    %c0_i32 = arith.constant 0 : i32
    %c0_i32_0 = arith.constant 0 : i32
    return %arg0, %c0_i32 : i32, i32
  }
  func.func @transform_4(%arg0: i32, %arg1: i32) -> (i32, i32) {
    %c0_i32 = arith.constant 0 : i32
    %c0_i32_0 = arith.constant 0 : i32
    return %arg0, %c0_i32 : i32, i32
  }
}

</mosaic_0001>

<llo_original>
// kernel: tpu_custom_call.1
$region0: #{tpu_custom_call.1}
  #allocation0 [shape = 'u32[]', space=smem, size = 0x4, offset = 0x4, fixed_abs, tag = 'smem constant byte address 0x4 - core index']
  #allocation1 [shape = 'u32[144,128]{1,0:T(1,128)}', space=vmem, size = 0x12000, scoped, tag = 'internal scratch']
  %s0 = inlined_call_operand.hbm [shape: f32[8,256], index: 0, kind: input, shape index: {}]
  %s1 = inlined_call_operand.hbm [shape: f32[8,256], index: 1, kind: input, shape index: {}]
  %s2 = inlined_call_operand.hbm [shape: f32[8,256], index: 2, kind: input, shape index: {}]
  %s3 = inlined_call_operand.hbm [shape: f32[16,256], index: 3, kind: output, shape index: {0}]
  %s4 = inlined_call_operand.hbm [shape: f32[16,256], index: 4, kind: output, shape index: {1}]
  %5 = xla_tuple %s3, %s4
  %s6 = sld [smem:[#allocation0]]
  $region69: #{tpu_custom_call.1} parent=0
    _
  %s8 = ssub.s32 1, %s6
  %s9 = scalar_select 0, %s8, %s6
  $region1: #{tpu_custom_call.1} parent=0
    #allocation2 [shape = 'u8[16384]{0}', space=vmem, size = 0x4000, scoped, tag = 'input window, operand 0']
    #allocation3 [shape = 's32[2]{0}', space=sflag, size = 0x8, scoped, tag = 'scoped memory for tpu_custom_call.1']
    #allocation4 [shape = 's32[2]{0}', space=sflag, size = 0x8, scoped, tag = 'scoped memory for tpu_custom_call.1']
    #allocation5 [shape = 'u8[16384]{0}', space=vmem, size = 0x4000, scoped, tag = 'input window, operand 1']
    #allocation6 [shape = 's32[2]{0}', space=sflag, size = 0x8, scoped, tag = 'scoped memory for tpu_custom_call.1']
    #allocation7 [shape = 'u8[16384]{0}', space=vmem, size = 0x4000, scoped, tag = 'input window, operand 2']
    #allocation8 [shape = 'u8[16384]{0}', space=vmem, size = 0x4000, scoped, tag = 'output window, operand 0']
    #allocation9 [shape = 'u8[16384]{0}', space=vmem, size = 0x4000, scoped, tag = 'output window, operand 1']
    #allocation10 [shape = 's32[2]{0}', space=sflag, size = 0x8, scoped, tag = 'scoped memory for tpu_custom_call.1']
    %10 = vsyncpa [#allocation3], 0
    %s11 = scalar_lea.sflag [#allocation3], 1
    %12 = vsyncpa %s11, 0
    %13 = vsyncpa [#allocation6], 0
    %s14 = scalar_lea.sflag [#allocation6], 1
    %15 = vsyncpa %s14, 0
    %16 = vsyncpa [#allocation4], 0
    %s17 = scalar_lea.sflag [#allocation4], 1
    %18 = vsyncpa %s17, 0
    %19 = vsyncpa [#allocation10], 0
    %s20 = scalar_lea.sflag [#allocation10], 1
    %21 = vsyncpa %s20, 0
    loop: start=0, step=1, limit=4
    $region2: #{tpu_custom_call.1} parent=1 // loop_pre_header
      _
    $region3: #{tpu_custom_call.1} parent=1 // loop_header
      %s23 = sphi 0, %s27
      %p24 = scmp.ge.s32.totalorder %s23, 4
      %s30 = sphi 0, %s42
      %s31 = sphi 0, %s38
      %s32 = sphi 0, %s30
      %s33 = sphi 0, %s31
      %s34 = sphi 0, %s32
      %s35 = sphi 0, %s33
      %s51 = sphi 0, %s53
      %s54 = sphi 0, %s51
      %s55 = sphi 0, %s54
      %s71 = sphi 0, %s55
      %s83 = sphi 0, %s85
      %s86 = sphi 0, %s83
      %s87 = sphi 0, %s86
      %s103 = sphi 0, %s87
      %s115 = sphi 0, %s117
      %s118 = sphi 0, %s115
      %s119 = sphi 0, %s118
      %s135 = sphi 0, %s119
      %s141 = sphi 0, %s143
      %s144 = sphi 0, %s141
      %s145 = sphi 0, %s144
      %s161 = sphi 0, %s145
      %s167 = sphi 0, %s169
      %s170 = sphi 0, %s167
      %s171 = sphi 0, %s170
      %s187 = sphi 0, %s171
    $region4: #{tpu_custom_call.1} parent=1 // loop_header_branch
      %26 = sbr.rel (%p24) target = $region8
    $region5: #{tpu_custom_call.1} parent=1 // loop_body
      %s28 = ssub.s32 %s23, 1
      %s29 = ssub.s32 %s23, 2
      %s36 = sadd.s32 1, %s31
      %p37 = scmp.ge.s32.totalorder %s36, 1
      %s38 = scalar_select %p37, 0, %s36
      %s39 = sadd.s32 1, %s30
      %s40 = scalar_select %p37, %s39, %s30
      %p41 = scmp.ge.s32.totalorder %s40, 2
      %s42 = scalar_select %p41, 0, %s40
      %s43 = sadd.s32 %s30, %s31
      %p44 = scmp.lt.s32.totalorder %s43, 0
      %s45 = scalar_select %p44, %s43, 0
      %s46 = sadd.s32 %s42, %s38
      %p47 = scmp.lt.s32.totalorder %s46, 0
      %s48 = scalar_select %p47, %s46, 0
      %s49 = ssub.s32 %s45, %s48
      %p50 = scmp.eq.s32.totalorder %s49, 0
      %s52 = sadd.s32 %s51, 1
      %s53 = scalar_select %p50, %s51, %s52
      %p56 = pneg %p50
      %p57 = scmp.eq.s32.totalorder %s23, 1
      %p58 = por %p56, %p57
      %p59 = scmp.ne.s32.totalorder %s51, %s54
      %p60 = scmp.eq.s32.totalorder %s23, 0
      %p61 = por %p59, %p60
      %p62 = scmp.ne.s32.totalorder %s51, %s54
      %p63 = scmp.eq.s32.totalorder %s28, 1
      %p64 = por %p62, %p63
      %p65 = scmp.ne.s32.totalorder %s54, %s55
      %p66 = scmp.eq.s32.totalorder %s28, 0
      %p67 = por %p65, %p66
      %p68 = scmp.ne.s32.totalorder %s54, %s55
      %p69 = scmp.eq.s32.totalorder %s29, 1
      %p70 = por %p68, %p69
      %p72 = scmp.ne.s32.totalorder %s55, %s71
      %p73 = scmp.eq.s32.totalorder %s29, 0
      %p74 = por %p72, %p73
      %s75 = sadd.s32 %s30, %s31
      %p76 = scmp.lt.s32.totalorder %s75, 0
      %s77 = scalar_select %p76, %s75, 0
      %s78 = sadd.s32 %s42, %s38
      %p79 = scmp.lt.s32.totalorder %s78, 0
      %s80 = scalar_select %p79, %s78, 0
      %s81 = ssub.s32 %s77, %s80
      %p82 = scmp.eq.s32.totalorder %s81, 0
      %s84 = sadd.s32 %s83, 1
      %s85 = scalar_select %p82, %s83, %s84
      %p88 = pneg %p82
      %p89 = scmp.eq.s32.totalorder %s23, 1
      %p90 = por %p88, %p89
      %p91 = scmp.ne.s32.totalorder %s83, %s86
      %p92 = scmp.eq.s32.totalorder %s23, 0
      %p93 = por %p91, %p92
      %p94 = scmp.ne.s32.totalorder %s83, %s86
      %p95 = scmp.eq.s32.totalorder %s28, 1
      %p96 = por %p94, %p95
      %p97 = scmp.ne.s32.totalorder %s86, %s87
      %p98 = scmp.eq.s32.totalorder %s28, 0
      %p99 = por %p97, %p98
      %p100 = scmp.ne.s32.totalorder %s86, %s87
      %p101 = scmp.eq.s32.totalorder %s29, 1
      %p102 = por %p100, %p101
      %p104 = scmp.ne.s32.totalorder %s87, %s103
      %p105 = scmp.eq.s32.totalorder %s29, 0
      %p106 = por %p104, %p105
      %s107 = sadd.s32 %s30, %s31
      %p108 = scmp.lt.s32.totalorder %s107, 0
      %s109 = scalar_select %p108, %s107, 0
      %s110 = sadd.s32 %s42, %s38
      %p111 = scmp.lt.s32.totalorder %s110, 0
      %s112 = scalar_select %p111, %s110, 0
      %s113 = ssub.s32 %s109, %s112
      %p114 = scmp.eq.s32.totalorder %s113, 0
      %s116 = sadd.s32 %s115, 1
      %s117 = scalar_select %p114, %s115, %s116
      %p120 = pneg %p114
      %p121 = scmp.eq.s32.totalorder %s23, 1
      %p122 = por %p120, %p121
      %p123 = scmp.ne.s32.totalorder %s115, %s118
      %p124 = scmp.eq.s32.totalorder %s23, 0
      %p125 = por %p123, %p124
      %p126 = scmp.ne.s32.totalorder %s115, %s118
      %p127 = scmp.eq.s32.totalorder %s28, 1
      %p128 = por %p126, %p127
      %p129 = scmp.ne.s32.totalorder %s118, %s119
      %p130 = scmp.eq.s32.totalorder %s28, 0
      %p131 = por %p129, %p130
      %p132 = scmp.ne.s32.totalorder %s118, %s119
      %p133 = scmp.eq.s32.totalorder %s29, 1
      %p134 = por %p132, %p133
      %p136 = scmp.ne.s32.totalorder %s119, %s135
      %p137 = scmp.eq.s32.totalorder %s29, 0
      %p138 = por %p136, %p137
      %s139 = ssub.s32 %s30, %s42
      %p140 = scmp.eq.s32.totalorder %s139, 0
      %s142 = sadd.s32 %s141, 1
      %s143 = scalar_select %p140, %s141, %s142
      %p146 = pneg %p140
      %p147 = scmp.eq.s32.totalorder %s23, 1
      %p148 = por %p146, %p147
      %p149 = scmp.ne.s32.totalorder %s141, %s144
      %p150 = scmp.eq.s32.totalorder %s23, 0
      %p151 = por %p149, %p150
      %p152 = scmp.ne.s32.totalorder %s141, %s144
      %p153 = scmp.eq.s32.totalorder %s28, 1
      %p154 = por %p152, %p153
      %p155 = scmp.ne.s32.totalorder %s144, %s145
      %p156 = scmp.eq.s32.totalorder %s28, 0
      %p157 = por %p155, %p156
      %p158 = scmp.ne.s32.totalorder %s144, %s145
      %p159 = scmp.eq.s32.totalorder %s29, 1
      %p160 = por %p158, %p159
      %p162 = scmp.ne.s32.totalorder %s145, %s161
      %p163 = scmp.eq.s32.totalorder %s29, 0
      %p164 = por %p162, %p163
      %s165 = ssub.s32 %s30, %s42
      %p166 = scmp.eq.s32.totalorder %s165, 0
      %s168 = sadd.s32 %s167, 1
      %s169 = scalar_select %p166, %s167, %s168
      %p172 = pneg %p166
      %p173 = scmp.eq.s32.totalorder %s23, 1
      %p174 = por %p172, %p173
      %p175 = scmp.ne.s32.totalorder %s167, %s170
      %p176 = scmp.eq.s32.totalorder %s23, 0
      %p177 = por %p175, %p176
      %p178 = scmp.ne.s32.totalorder %s167, %s170
      %p179 = scmp.eq.s32.totalorder %s28, 1
      %p180 = por %p178, %p179
      %p181 = scmp.ne.s32.totalorder %s170, %s171
      %p182 = scmp.eq.s32.totalorder %s28, 0
      %p183 = por %p181, %p182
      %p184 = scmp.ne.s32.totalorder %s170, %s171
      %p185 = scmp.eq.s32.totalorder %s29, 1
      %p186 = por %p184, %p185
      %p188 = scmp.ne.s32.totalorder %s171, %s187
      %p189 = scmp.eq.s32.totalorder %s29, 0
      %p190 = por %p188, %p189
      %p191 = scmp.le.s32.totalorder 1, %s23
      %p192 = scmp.lt.s32.totalorder %s23, 3
      %p193 = pnand %p191, %p192
      %p194 = pneg %p193
      // Predicated region
      $region9: #{tpu_custom_call.1} parent=5 // pred_check
        _
      $region10: #{tpu_custom_call.1} parent=5 // pred_check_branch
        %196 = sbr.rel (%p193) target = $region12
      $region11: #{tpu_custom_call.1} parent=5 // pred_region
        %s197 = ssub.s32 %s23, 1
      $region12: #{tpu_custom_call.1} parent=5 // pred_fallthru
        _
      %p198 = scmp.lt.s32.totalorder %s23, 2
      // Predicated region
      $region13: #{tpu_custom_call.1} parent=5 // pred_check
        %p199 = pneg %p198
      $region14: #{tpu_custom_call.1} parent=5 // pred_check_branch
        %201 = sbr.rel (%p199) target = $region16
      $region15: #{tpu_custom_call.1} parent=5 // pred_region
        // Predicated region
        $region17: #{tpu_custom_call.1} parent=15 // pred_check
          %p202 = pneg %p61
        $region18: #{tpu_custom_call.1} parent=15 // pred_check_branch
          %204 = sbr.rel (%p202) target = $region20
        $region19: #{tpu_custom_call.1} parent=15 // pred_region
          %s205 = sand.u32 %s51, 1
          %s206 = scalar_lea.sflag [#allocation3], %s205
          %s207 = sand.u32 %s51, 1
          %s208 = smul.addr %s207, 16
          %s209 = scalar_lea.vmem [#allocation2], %s208
          %s210 = sadd.s32 %s30, %s31
          %p211 = scmp.lt.s32.totalorder %s210, 0
          %s212 = scalar_select %p211, %s210, 0
          %s214 = ssub.s32 256, 256
          %215 = vsyncadd %s206, %s214
          %s216 = smul.addr %s212, 2
          %s217 = smul.addr %s216, 128
          %s218 = scalar_lea.hbm %s0, %s217
          %s220 = sshll.u32 %s209, 4
          %s221 = int_to_ptr.vmem [resolvable:$true] %s220
          %223 = dma.hbm_to_vmem [thread:$0]  %s218, 256, %s221, %s206
        $region20: #{tpu_custom_call.1} parent=15 // pred_fallthru
          _
        // Predicated region
        $region21: #{tpu_custom_call.1} parent=15 // pred_check
          %p224 = pneg %p93
        $region22: #{tpu_custom_call.1} parent=15 // pred_check_branch
          %226 = sbr.rel (%p224) target = $region24
        $region23: #{tpu_custom_call.1} parent=15 // pred_region
          %s227 = sand.u32 %s23, 1
          %s228 = scalar_lea.sflag [#allocation6], %s227
          %s229 = sand.u32 %s83, 1
          %s230 = smul.addr %s229, 16
          %s231 = scalar_lea.vmem [#allocation5], %s230
          %s232 = sadd.s32 %s30, %s31
          %p233 = scmp.lt.s32.totalorder %s232, 0
          %s234 = scalar_select %p233, %s232, 0
          %s236 = ssub.s32 256, 256
          %237 = vsyncadd %s228, %s236
          %s238 = smul.addr %s234, 2
          %s239 = smul.addr %s238, 128
          %s240 = scalar_lea.hbm %s1, %s239
          %s242 = sshll.u32 %s231, 4
          %s243 = int_to_ptr.vmem [resolvable:$true] %s242
          %245 = dma.hbm_to_vmem [thread:$0]  %s240, 256, %s243, %s228
        $region24: #{tpu_custom_call.1} parent=15 // pred_fallthru
          _
        // Predicated region
        $region25: #{tpu_custom_call.1} parent=15 // pred_check
          %p246 = pneg %p125
        $region26: #{tpu_custom_call.1} parent=15 // pred_check_branch
          %248 = sbr.rel (%p246) target = $region28
        $region27: #{tpu_custom_call.1} parent=15 // pred_region
          %s249 = sand.u32 %s23, 1
          %s250 = scalar_lea.sflag [#allocation6], %s249
          %s251 = sand.u32 %s115, 1
          %s252 = smul.addr %s251, 16
          %s253 = scalar_lea.vmem [#allocation7], %s252
          %s254 = sadd.s32 %s30, %s31
          %p255 = scmp.lt.s32.totalorder %s254, 0
          %s256 = scalar_select %p255, %s254, 0
          %s258 = ssub.s32 256, 256
          %259 = vsyncadd %s250, %s258
          %s260 = smul.addr %s256, 2
          %s261 = smul.addr %s260, 128
          %s262 = scalar_lea.hbm %s2, %s261
          %s264 = sshll.u32 %s253, 4
          %s265 = int_to_ptr.vmem [resolvable:$true] %s264
          %267 = dma.hbm_to_vmem [thread:$0]  %s262, 256, %s265, %s250
        $region28: #{tpu_custom_call.1} parent=15 // pred_fallthru
          _
      $region16: #{tpu_custom_call.1} parent=5 // pred_fallthru
        _
      %p268 = scmp.le.s32.totalorder 1, %s23
      %p269 = scmp.lt.s32.totalorder %s23, 3
      %p270 = pnand %p268, %p269
      %p271 = pneg %p270
      // Predicated region
      $region29: #{tpu_custom_call.1} parent=5 // pred_check
        _
      $region30: #{tpu_custom_call.1} parent=5 // pred_check_branch
        %273 = sbr.rel (%p270) target = $region32
      $region31: #{tpu_custom_call.1} parent=5 // pred_region
        %s274 = ssub.s32 %s23, 1
        %s275 = sand.u32 %s54, 1
        %s276 = scalar_lea.sflag [#allocation3], %s275
        %s277 = sand.u32 %s54, 1
        %s278 = smul.addr %s277, 16
        %s279 = scalar_lea.vmem [#allocation2], %s278
        // Predicated region
        $region33: #{tpu_custom_call.1} parent=31 // pred_check
          %p280 = pneg %p67
        $region34: #{tpu_custom_call.1} parent=31 // pred_check_branch
          %282 = sbr.rel (%p280) target = $region36
        $region35: #{tpu_custom_call.1} parent=31 // pred_region
          %283 = dma.done %s276, 256
        $region36: #{tpu_custom_call.1} parent=31 // pred_fallthru
          _
        %s284 = sand.u32 %s28, 1
        %s285 = scalar_lea.sflag [#allocation6], %s284
        %s286 = sand.u32 %s86, 1
        %s287 = smul.addr %s286, 16
        %s288 = scalar_lea.vmem [#allocation5], %s287
        // Predicated region
        $region37: #{tpu_custom_call.1} parent=31 // pred_check
          %p289 = pneg %p99
        $region38: #{tpu_custom_call.1} parent=31 // pred_check_branch
          %291 = sbr.rel (%p289) target = $region40
        $region39: #{tpu_custom_call.1} parent=31 // pred_region
          %292 = dma.done %s285, 256
        $region40: #{tpu_custom_call.1} parent=31 // pred_fallthru
          _
        %s293 = sand.u32 %s28, 1
        %s294 = scalar_lea.sflag [#allocation6], %s293
        %s295 = sand.u32 %s118, 1
        %s296 = smul.addr %s295, 16
        %s297 = scalar_lea.vmem [#allocation7], %s296
        // Predicated region
        $region41: #{tpu_custom_call.1} parent=31 // pred_check
          %p298 = pneg %p131
        $region42: #{tpu_custom_call.1} parent=31 // pred_check_branch
          %300 = sbr.rel (%p298) target = $region44
        $region43: #{tpu_custom_call.1} parent=31 // pred_region
          %301 = dma.done %s294, 256
        $region44: #{tpu_custom_call.1} parent=31 // pred_fallthru
          _
        %s302 = sand.u32 %s54, 1
        %s303 = scalar_lea.sflag [#allocation3], %s302
        %s304 = sand.u32 %s54, 1
        %s305 = smul.addr %s304, 16
        %s306 = scalar_lea.vmem [#allocation2], %s305
        %p307 = pneg %p67
        %p308 = pneg %p64
        %s309 = sand.u32 %s28, 1
        %s310 = scalar_lea.sflag [#allocation6], %s309
        %s311 = sand.u32 %s86, 1
        %s312 = smul.addr %s311, 16
        %s313 = scalar_lea.vmem [#allocation5], %s312
        %p314 = pneg %p99
        %p315 = pneg %p96
        %s316 = sand.u32 %s28, 1
        %s317 = scalar_lea.sflag [#allocation6], %s316
        %s318 = sand.u32 %s118, 1
        %s319 = smul.addr %s318, 16
        %s320 = scalar_lea.vmem [#allocation7], %s319
        %p321 = pneg %p131
        %p322 = pneg %p128
        %p323 = pneg %p157
        %p324 = pneg %p154
        %s325 = sand.u32 %s144, 1
        %s326 = scalar_lea.sflag [#allocation4], %s325
        %s327 = sand.u32 %s144, 1
        %s328 = smul.addr %s327, 16
        %s329 = scalar_lea.vmem [#allocation8], %s328
        %p330 = pneg %p183
        %p331 = pneg %p180
        %s332 = sand.u32 %s170, 1
        %s333 = scalar_lea.sflag [#allocation10], %s332
        %s334 = sand.u32 %s170, 1
        %s335 = smul.addr %s334, 16
        %s336 = scalar_lea.vmem [#allocation9], %s335
        %s337 = sadd.s32 %s32, %s33
        %p338 = scmp.lt.s32.totalorder %s337, 0
        %s339 = scalar_select %p338, %s337, 0
        %s340 = sadd.s32 %s32, %s33
        %p341 = scmp.lt.s32.totalorder %s340, 0
        %s342 = scalar_select %p341, %s340, 0
        %s343 = sadd.s32 %s32, %s33
        %p344 = scmp.lt.s32.totalorder %s343, 0
        %s345 = scalar_select %p344, %s343, 0
        %p346 = scmp.eq.s32.totalorder %s33, 0
        // Predicated region
        $region45: #{tpu_custom_call.1} parent=31 // pred_check
          %p347 = pneg %p346
        $region46: #{tpu_custom_call.1} parent=31 // pred_check_branch
          %349 = sbr.rel (%p347) target = $region48
        $region47: #{tpu_custom_call.1} parent=31 // pred_region
          %350 = vst [vmem:[%s329] sm:$0xff] 0.0
          %351 = vst [vmem:[%s329 + $0x8] sm:$0xff] 0.0
          %352 = vst [vmem:[%s336] sm:$0xff] 0.0
          %353 = vst [vmem:[%s336 + $0x8] sm:$0xff] 0.0
        $region48: #{tpu_custom_call.1} parent=31 // pred_fallthru
          _
        %v354 = vld [vmem:[%s279] sm:$0xff]
        %v355 = vld [vmem:[%s279 + $0x8] sm:$0xff]
        %v356 = vld [vmem:[%s288] sm:$0xff]
        %v357 = vld [vmem:[%s288 + $0x8] sm:$0xff]
        %v358 = vld [vmem:[%s297] sm:$0xff]
        %v359 = vld [vmem:[%s297 + $0x8] sm:$0xff]
        %s360 = sadd.s32 %s32, %s33
        %s361 = smul.u32 %s360, 8
        %v362 = vlaneseq
        %v363 = vshrl.u32 %v362, 7
        %v364 = vstv %s361
        %v365 = vadd.s32 %v364, %v363
        %vm366 = vcmp.lt.s32.totalorder %v365, 8
        %v367 = vsub.f32 %v354, %v356
        %v368 = vsub.f32 %v355, %v357
        %v369 = vmul.f32 %v367, %v367
        %v370 = vmul.f32 %v368, %v368
        %v371 = vmul.f32 %v369, %v358
        %v372 = vmul.f32 %v370, %v359
        %v373 = vsel %vm366, %v371, 0.0
        %v374 = vsel %vm366, %v372, 0.0
        %v375 = vsel %vm366, %v358, 0.0
        %v376 = vsel %vm366, %v359, 0.0
        %v377 = vld [vmem:[%s329] sm:$0xff]
        %v378 = vld [vmem:[%s329 + $0x8] sm:$0xff]
        %v379 = vadd.f32 %v373, 0.0
        %v380 = vadd.f32 %v374, 0.0
        %v381 = vadd.f32 %v377, %v379
        %v382 = vadd.f32 %v378, %v380
        %383 = vst [vmem:[%s329] sm:$0xff] %v381
        %384 = vst [vmem:[%s329 + $0x8] sm:$0xff] %v382
        %v385 = vld [vmem:[%s336] sm:$0xff]
        %v386 = vld [vmem:[%s336 + $0x8] sm:$0xff]
        %v387 = vadd.f32 %v375, 0.0
        %v388 = vadd.f32 %v376, 0.0
        %v389 = vadd.f32 %v385, %v387
        %v390 = vadd.f32 %v386, %v388
        %391 = vst [vmem:[%s336] sm:$0xff] %v389
        %392 = vst [vmem:[%s336 + $0x8] sm:$0xff] %v390
        %s393 = sand.u32 %s144, 1
        %s394 = scalar_lea.sflag [#allocation4], %s393
        %s395 = sand.u32 %s144, 1
        %s396 = smul.addr %s395, 16
        %s397 = scalar_lea.vmem [#allocation8], %s396
        %s398 = sand.u32 %s170, 1
        %s399 = scalar_lea.sflag [#allocation10], %s398
        %s400 = sand.u32 %s170, 1
        %s401 = smul.addr %s400, 16
        %s402 = scalar_lea.vmem [#allocation9], %s401
        // Predicated region
        $region49: #{tpu_custom_call.1} parent=31 // pred_check
          %p403 = pneg %p154
        $region50: #{tpu_custom_call.1} parent=31 // pred_check_branch
          %405 = sbr.rel (%p403) target = $region52
        $region51: #{tpu_custom_call.1} parent=31 // pred_region
          %s407 = ssub.s32 256, 256
          %408 = vsyncadd %s394, %s407
          %s409 = smul.addr %s32, 2
          %s410 = smul.addr %s409, 128
          %s411 = scalar_lea.hbm %s3, %s410
          %s413 = sshll.u32 %s397, 4
          %s414 = int_to_ptr.vmem [resolvable:$true] %s413
          %416 = dma.vmem_to_hbm [thread:$0]  %s414, 256, %s411, %s394
        $region52: #{tpu_custom_call.1} parent=31 // pred_fallthru
          _
        // Predicated region
        $region53: #{tpu_custom_call.1} parent=31 // pred_check
          %p417 = pneg %p180
        $region54: #{tpu_custom_call.1} parent=31 // pred_check_branch
          %419 = sbr.rel (%p417) target = $region56
        $region55: #{tpu_custom_call.1} parent=31 // pred_region
          %s421 = ssub.s32 256, 256
          %422 = vsyncadd %s399, %s421
          %s423 = smul.addr %s32, 2
          %s424 = smul.addr %s423, 128
          %s425 = scalar_lea.hbm %s4, %s424
          %s427 = sshll.u32 %s402, 4
          %s428 = int_to_ptr.vmem [resolvable:$true] %s427
          %430 = dma.vmem_to_hbm [thread:$0]  %s428, 256, %s425, %s399
        $region56: #{tpu_custom_call.1} parent=31 // pred_fallthru
          _
      $region32: #{tpu_custom_call.1} parent=5 // pred_fallthru
        _
      %p431 = scmp.le.s32.totalorder 2, %s23
      // Predicated region
      $region57: #{tpu_custom_call.1} parent=5 // pred_check
        %p432 = pneg %p431
      $region58: #{tpu_custom_call.1} parent=5 // pred_check_branch
        %434 = sbr.rel (%p432) target = $region60
      $region59: #{tpu_custom_call.1} parent=5 // pred_region
        %s435 = ssub.s32 %s23, 2
        // Predicated region
        $region61: #{tpu_custom_call.1} parent=59 // pred_check
          %p436 = pneg %p160
        $region62: #{tpu_custom_call.1} parent=59 // pred_check_branch
          %438 = sbr.rel (%p436) target = $region64
        $region63: #{tpu_custom_call.1} parent=59 // pred_region
          %s439 = sand.u32 %s145, 1
          %s440 = scalar_lea.sflag [#allocation4], %s439
          %s441 = sand.u32 %s145, 1
          %s442 = smul.addr %s441, 16
          %s443 = scalar_lea.vmem [#allocation8], %s442
          %444 = dma.done %s440, 256
        $region64: #{tpu_custom_call.1} parent=59 // pred_fallthru
          _
        // Predicated region
        $region65: #{tpu_custom_call.1} parent=59 // pred_check
          %p445 = pneg %p186
        $region66: #{tpu_custom_call.1} parent=59 // pred_check_branch
          %447 = sbr.rel (%p445) target = $region68
        $region67: #{tpu_custom_call.1} parent=59 // pred_region
          %s448 = sand.u32 %s171, 1
          %s449 = scalar_lea.sflag [#allocation10], %s448
          %s450 = sand.u32 %s171, 1
          %s451 = smul.addr %s450, 16
          %s452 = scalar_lea.vmem [#allocation9], %s451
          %453 = dma.done %s449, 256
        $region68: #{tpu_custom_call.1} parent=59 // pred_fallthru
          _
      $region60: #{tpu_custom_call.1} parent=5 // pred_fallthru
        _
    $region6: #{tpu_custom_call.1} parent=1 // loop_footer
      %s27 = sadd.s32 1, %s23
    $region7: #{tpu_custom_call.1} parent=1 // loop_footer_branch
      %22 = sbr.rel target = $region3
    $region8: #{tpu_custom_call.1} parent=1 // loop_exit
      _
    %454 = vsyncpa [#allocation3], 1
    %s455 = scalar_lea.sflag [#allocation3], 1
    %456 = vsyncpa %s455, 1
    %457 = vsyncpa [#allocation6], 1
    %s458 = scalar_lea.sflag [#allocation6], 1
    %459 = vsyncpa %s458, 1
    %460 = vsyncpa [#allocation4], 1
    %s461 = scalar_lea.sflag [#allocation4], 1
    %462 = vsyncpa %s461, 1
    %463 = vsyncpa [#allocation10], 1
    %s464 = scalar_lea.sflag [#allocation10], 1
    %465 = vsyncpa %s464, 1

</llo_original>
